<compile_context>
chip_gen: v7x
topology: tpu7x:2x2x1
jax: 0.10.0
libtpu: 0.0.40
codegen_flags: <defaults>
</compile_context>

<pallas_src>
import functools

import jax
import jax.numpy as jnp
from jax import lax
from jax.experimental import pallas as pl
from jax.experimental.pallas import tpu as pltpu


# ------------------------------- kernels ------------------------------------

def _stats_kernel(x_ref, sum_ref, xxt_ref, *, tile_hw, hw_total, mask_tail):
    """Per-batch partial stats: sum_hw(x) (C,1) and x @ x^T (C,C).

    Output blocks are indexed only by the batch grid axis, so the hw axis of
    the grid accumulates into resident VMEM output blocks; every n owns its
    own output block, which lets the batch axis be marked "parallel"
    (megacore on v7x) without races.

    TODO(synk): the fused (uncentered) covariance E[xx^T]-mean*mean^T can lose
    precision when |mean| >> std; switch to a two-pass centered form for
    un-normalized inputs.  Accumulation is kept in f32.
    """
    j = pl.program_id(1)

    @pl.when(j == 0)
    def _():
        sum_ref[...] = jnp.zeros_like(sum_ref)
        xxt_ref[...] = jnp.zeros_like(xxt_ref)

    xb = x_ref[...]                                        # (C, tile_hw), native dtype
    if mask_tail:
        lane = lax.broadcasted_iota(jnp.int32, xb.shape, 1)
        valid = (j * tile_hw + lane) < hw_total
        xb = jnp.where(valid, xb, jnp.zeros_like(xb))

    # Gram matrix on the MXU; operands stay in the input dtype (bf16 feeds the
    # bf16 MXU path), f32 accumulation.  Contraction (1,1) == x @ x^T without
    # materializing a transpose.
    xxt_ref[...] += lax.dot_general(
        xb, xb, dimension_numbers=(((1,), (1,)), ((), ())),
        preferred_element_type=jnp.float32)
    sum_ref[...] += jnp.sum(xb.astype(jnp.float32), axis=1, keepdims=True)


def _newton_kernel(sum_ref, xxt_ref, rot_ref, mean_ref, wm_ref, a_ref, b_ref,
                   *, T, eps, m_total):
    """Reduce per-batch partials, Newton-Schulz whitening, fold A=R@wm, b=A@mean."""
    c = wm_ref.shape[0]
    sum_all = jnp.sum(sum_ref[...], axis=0)                # (C, 1) f32
    xxt_all = jnp.sum(xxt_ref[...], axis=0)                # (C, C) f32

    mean = sum_all * (1.0 / m_total)
    rows = lax.broadcasted_iota(jnp.int32, (c, c), 0)
    cols = lax.broadcasted_iota(jnp.int32, (c, c), 1)
    eye = (rows == cols).astype(jnp.float32)               # identity in-kernel
    mmT = lax.dot_general(mean, mean,
                          dimension_numbers=(((1,), (1,)), ((), ())),
                          preferred_element_type=jnp.float32)
    sigma = xxt_all * (1.0 / m_total) - mmT + eps * eye

    rTr = 1.0 / jnp.sum(sigma * eye)                       # 1/trace(Sigma)
    sigma_n = sigma * rTr

    P = eye
    for _ in range(T):                                     # static unroll (T small)
        P2 = jnp.dot(P, P, preferred_element_type=jnp.float32)
        P3 = jnp.dot(P2, P, preferred_element_type=jnp.float32)
        P = 1.5 * P - 0.5 * jnp.dot(P3, sigma_n, preferred_element_type=jnp.float32)

    wm = P * jnp.sqrt(rTr)
    mean_ref[...] = mean
    wm_ref[...] = wm
    A = jnp.dot(rot_ref[...], wm, preferred_element_type=jnp.float32)
    a_ref[...] = A
    b_ref[...] = jnp.dot(A, mean, preferred_element_type=jnp.float32)


def _apply_kernel(x_ref, a_ref, b_ref, out_ref):
    """out = A @ x - b for one (C, tile_hw) slab (A = R@wm, b = A@mean).

    x stays in its native dtype (bf16 MXU path when applicable); any garbage
    columns of a ragged tail block stay column-local and are dropped on the
    partial writeback.
    """
    y = jnp.dot(a_ref[...], x_ref[...],
                preferred_element_type=jnp.float32) - b_ref[...]
    out_ref[...] = y.astype(out_ref.dtype)


# ------------------------------- wrapper -------------------------------------

def _vmem_limit_bytes():
    """Scoped VMEM limit derived from the chip (~0.55x physical), with fallback."""
    cap = None
    try:
        info_fn = getattr(pltpu, "get_tpu_info", None)
        if info_fn is not None:
            cap = int(info_fn().vmem_capacity_bytes)
    except Exception:
        cap = None
    if not cap:
        cap = 64 << 20                # conservative default (v7x per-TC VMEM)
    return max(16 << 20, min(int(cap * 0.55), 96 << 20))


def _pick_tile_hw(hw, c, itemsize, vmem_limit):
    """Spatial tile sized from the VMEM budget (target ~2-6 MiB per x block).

    The apply pass keeps 4 big blocks live (x + out, double-buffered), so each
    block is capped at ~vmem_limit/8.  The tile is a multiple of 128 (lane
    tile) unless HW itself is smaller; ragged tails are masked in-kernel.
    """
    per_block_budget = min(6 << 20, vmem_limit // 8)
    tile = per_block_budget // (c * itemsize)
    tile = min(tile, 32768)
    tile = max(128, (tile // 128) * 128)
    if hw <= tile:
        return hw
    return tile


def iter_norm_rotation_forward(X, running_mean, running_wm, running_rot, *,
                               T=10, eps=1e-5, momentum=0.05, training=True,
                               max_tile_hw=None):
    """Forward pass of IterNormRotation (num_groups=1, affine=False, mode=-1)."""
    N, C, H, W = X.shape
    HW = H * W
    M = N * HW

    vmem_limit = _vmem_limit_bytes()
    itemsize = jnp.dtype(X.dtype).itemsize
    tile_hw = _pick_tile_hw(HW, C, itemsize, vmem_limit)
    if max_tile_hw is not None:
        tile_hw = min(tile_hw, max(128, (max_tile_hw // 128) * 128), HW)
    grid_hw = pl.cdiv(HW, tile_hw)
    mask_tail = (HW % tile_hw) != 0

    # Contiguous reshape -- no host-side transposes of X (nor of the output).
    x3d = X.reshape(N, C, HW)

    if training:
        sum_part, xxt_part = pl.pallas_call(
            functools.partial(_stats_kernel, tile_hw=tile_hw, hw_total=HW,
                              mask_tail=mask_tail),
            out_shape=(jax.ShapeDtypeStruct((N, C, 1), jnp.float32),
                       jax.ShapeDtypeStruct((N, C, C), jnp.float32)),
            grid_spec=pltpu.PrefetchScalarGridSpec(
                num_scalar_prefetch=0,
                grid=(N, grid_hw),
                in_specs=[pl.BlockSpec((None, C, tile_hw),
                                       lambda n, j: (n, 0, j))],
                out_specs=[pl.BlockSpec((None, C, 1), lambda n, j: (n, 0, 0)),
                           pl.BlockSpec((None, C, C), lambda n, j: (n, 0, 0))]),
            compiler_params=pltpu.CompilerParams(
                dimension_semantics=("parallel", "arbitrary"),
                vmem_limit_bytes=vmem_limit),
        )(x3d)

        # Reduce the per-batch partials inside the Newton kernel when they fit
        # VMEM comfortably; otherwise pre-reduce the tiny arrays in plain JAX.
        if N * C * C * 4 > (8 << 20):
            sum_part = jnp.sum(sum_part, axis=0, keepdims=True)
            xxt_part = jnp.sum(xxt_part, axis=0, keepdims=True)
        n_part = sum_part.shape[0]

        mean, wm, A, b = pl.pallas_call(
            functools.partial(_newton_kernel, T=T, eps=float(eps),
                              m_total=float(M)),
            out_shape=(jax.ShapeDtypeStruct((C, 1), jnp.float32),
                       jax.ShapeDtypeStruct((C, C), jnp.float32),
                       jax.ShapeDtypeStruct((C, C), jnp.float32),
                       jax.ShapeDtypeStruct((C, 1), jnp.float32)),
            grid_spec=pltpu.PrefetchScalarGridSpec(
                num_scalar_prefetch=0, grid=(1,),
                in_specs=[pl.BlockSpec((n_part, C, 1), lambda i: (0, 0, 0)),
                          pl.BlockSpec((n_part, C, C), lambda i: (0, 0, 0)),
                          pl.BlockSpec((C, C), lambda i: (0, 0))],
                out_specs=[pl.BlockSpec((C, 1), lambda i: (0, 0)),
                           pl.BlockSpec((C, C), lambda i: (0, 0)),
                           pl.BlockSpec((C, C), lambda i: (0, 0)),
                           pl.BlockSpec((C, 1), lambda i: (0, 0))]),
        )(sum_part, xxt_part, running_rot.astype(jnp.float32))

        new_running_mean = momentum * mean + (1.0 - momentum) * running_mean
        new_running_wm = momentum * wm + (1.0 - momentum) * running_wm
    else:
        wm = running_wm.astype(jnp.float32)
        A = jnp.dot(running_rot.astype(jnp.float32), wm,
                    preferred_element_type=jnp.float32)
        b = jnp.dot(A, running_mean.astype(jnp.float32),
                    preferred_element_type=jnp.float32)
        new_running_mean = running_mean
        new_running_wm = running_wm

    # Feed A in the input dtype when X is bf16 so the apply matmul takes the
    # bf16 MXU path; keep f32 otherwise.
    a_in = A.astype(X.dtype) if X.dtype == jnp.bfloat16 else A

    out3d = pl.pallas_call(
        _apply_kernel,
        out_shape=jax.ShapeDtypeStruct((N, C, HW), X.dtype),
        grid_spec=pltpu.PrefetchScalarGridSpec(
            num_scalar_prefetch=0,
            grid=(N, grid_hw),
            in_specs=[pl.BlockSpec((None, C, tile_hw), lambda n, j: (n, 0, j)),
                      pl.BlockSpec((C, C), lambda n, j: (0, 0)),
                      pl.BlockSpec((C, 1), lambda n, j: (0, 0))],
            out_specs=pl.BlockSpec((None, C, tile_hw), lambda n, j: (n, 0, j))),
        compiler_params=pltpu.CompilerParams(
            dimension_semantics=("parallel", "parallel"),
            vmem_limit_bytes=vmem_limit),
    )(x3d, a_in, b)

    out = out3d.reshape(N, C, H, W)
    return out, new_running_mean, new_running_wm


# ------------------------------ reference ------------------------------------

def reference_forward(X, running_rot, *, T=10, eps=1e-5):
    """Pure-JAX re-implementation of the PyTorch forward (training, mode=-1)."""
    N, C, H, W = X.shape
    M = N * H * W
    x = jnp.transpose(X.astype(jnp.float32), (1, 0, 2, 3)).reshape(1, C, M)
    mean = x.mean(-1, keepdims=True)
    xc = x - mean
    I = jnp.eye(C, dtype=jnp.float32)[None]
    sigma = eps * I + (xc @ jnp.swapaxes(xc, 1, 2)) / M
    rTr = 1.0 / jnp.sum(sigma * I)
    sigma_n = sigma * rTr
    P = I
    for _ in range(T):
        P = 1.5 * P - 0.5 * (P @ P @ P) @ sigma_n
    wm = P * jnp.sqrt(rTr)
    xn = (wm @ xc)[0]
    Xn = xn.reshape(C, N, H, W).transpose(1, 0, 2, 3)          # (N, C, H, W)
    Xh = jnp.einsum('bgchw,gdc->bgdhw',
                    Xn.reshape(N, 1, C, H, W),
                    running_rot.reshape(1, C, C))
    return Xh.reshape(N, C, H, W)


# --------------------------------- main ---------------------------------------

if __name__ == "__main__":
    key = jax.random.PRNGKey(0)
    kx, kr, kx2 = jax.random.split(key, 3)

    N, C, H, W = 2, 8, 16, 16       # num_features = num_channels = 8, groups = 1
    X = jax.random.normal(kx, (N, C, H, W), dtype=jnp.float32)

    # Buffers per __init__ (group dim g=1 squeezed out): mean zeros, wm identity.
    running_mean = jnp.zeros((C, 1), jnp.float32)
    running_wm = jnp.eye(C, dtype=jnp.float32)
    # Deterministic orthonormal rotation (exercises the rotation path; __init__
    # would set it to the identity).
    running_rot, _ = jnp.linalg.qr(
        jax.random.normal(kr, (C, C), dtype=jnp.float32))
    running_rot = running_rot.astype(jnp.float32)

    out, new_rm, new_rwm = iter_norm_rotation_forward(
        X, running_mean, running_wm, running_rot,
        T=10, eps=1e-5, momentum=0.05, training=True)
    jax.block_until_ready(out)

    ref = reference_forward(X, running_rot, T=10, eps=1e-5)
    assert out.shape == (N, C, H, W) and out.dtype == X.dtype
    assert jnp.allclose(out, ref, atol=2e-3, rtol=2e-3), "mismatch vs reference"

    # Exercise the ragged-tail path (HW not a multiple of the tile): HW=225,
    # tile capped at 128 -> 2 hw tiles with a masked tail.
    H2 = W2 = 15
    X2 = jax.random.normal(kx2, (N, C, H2, W2), dtype=jnp.float32)
    out2, _, _ = iter_norm_rotation_forward(
        X2, running_mean, running_wm, running_rot,
        T=10, eps=1e-5, momentum=0.05, training=True, max_tile_hw=128)
    jax.block_until_ready(out2)
    ref2 = reference_forward(X2, running_rot, T=10, eps=1e-5)
    assert jnp.allclose(out2, ref2, atol=2e-3, rtol=2e-3), "ragged-tail mismatch"

    # Also exercise the eval path once (uses running buffers directly).
    out_eval, _, _ = iter_norm_rotation_forward(
        X, running_mean, running_wm, running_rot,
        T=10, eps=1e-5, momentum=0.05, training=False)
    jax.block_until_ready(out_eval)
    assert out_eval.shape == (N, C, H, W)

    print("KERNEL_OK")
</pallas_src>

<mosaic_0001>
module attributes {stable_mosaic.version = 11 : i64} {
  func.func @_stats_kernel(%arg0: i32, %arg1: i32, %arg2: memref<1x8x256xf32, #tpu.memory_space<vmem>>, %arg3: memref<1x8x1xf32, #tpu.memory_space<vmem>>, %arg4: memref<1x8x8xf32, #tpu.memory_space<vmem>>) attributes {dimension_semantics = [#tpu.dimension_semantics<parallel>, #tpu.dimension_semantics<arbitrary>], iteration_bounds = array<i64: 2, 1>, scalar_prefetch = 0 : i64, scratch_operands = 0 : i64, tpu.core_type = #tpu.core_type<tc>, window_params = [{transform_indices = @transform_0, window_bounds = array<i64: 1, 8, 256>}, {transform_indices = @transform_1, window_bounds = array<i64: 1, 8, 1>}, {transform_indices = @transform_2, window_bounds = array<i64: 1, 8, 8>}]} {
    %c0_i32 = arith.constant 0 : i32
    %0 = arith.cmpi eq, %arg1, %c0_i32 : i32
    %1 = arith.extui %0 : i1 to i32
    %c0_i32_0 = arith.constant 0 : i32
    %2 = arith.cmpi ne, %1, %c0_i32_0 : i32
    scf.if %2 {
      %cst_16 = arith.constant 0.000000e+00 : f32
      %20 = vector.broadcast %cst_16 : f32 to vector<8x1xf32>
      %c0_17 = arith.constant 0 : index
      %c0_18 = arith.constant 0 : index
      %c0_19 = arith.constant 0 : index
      %21 = vector.load %arg3[%c0_17, %c0_18, %c0_19] : memref<1x8x1xf32, #tpu.memory_space<vmem>>, vector<1x8x1xf32>
      %22 = vector.shape_cast %21 : vector<1x8x1xf32> to vector<8x1xf32>
      %23 = vector.shape_cast %20 : vector<8x1xf32> to vector<1x8x1xf32>
      tpu.vector_store %arg3[%c0_17, %c0_18, %c0_19], %23 {strides = array<i32>} : memref<1x8x1xf32, #tpu.memory_space<vmem>>, vector<1x8x1xf32>,
      %cst_20 = arith.constant 0.000000e+00 : f32
      %24 = vector.broadcast %cst_20 : f32 to vector<8x8xf32>
      %c0_21 = arith.constant 0 : index
      %c0_22 = arith.constant 0 : index
      %c0_23 = arith.constant 0 : index
      %25 = vector.load %arg4[%c0_21, %c0_22, %c0_23] : memref<1x8x8xf32, #tpu.memory_space<vmem>>, vector<1x8x8xf32>
      %26 = vector.shape_cast %25 : vector<1x8x8xf32> to vector<8x8xf32>
      %27 = vector.shape_cast %24 : vector<8x8xf32> to vector<1x8x8xf32>
      tpu.vector_store %arg4[%c0_21, %c0_22, %c0_23], %27 {strides = array<i32>} : memref<1x8x8xf32, #tpu.memory_space<vmem>>, vector<1x8x8xf32>,
    } else {
    }
    %c0 = arith.constant 0 : index
    %c0_1 = arith.constant 0 : index
    %c0_2 = arith.constant 0 : index
    %3 = vector.load %arg2[%c0, %c0_1, %c0_2] : memref<1x8x256xf32, #tpu.memory_space<vmem>>, vector<1x8x256xf32>
    %4 = vector.shape_cast %3 : vector<1x8x256xf32> to vector<8x256xf32>
    %c0_3 = arith.constant 0 : index
    %c0_4 = arith.constant 0 : index
    %c0_5 = arith.constant 0 : index
    %5 = vector.load %arg4[%c0_3, %c0_4, %c0_5] : memref<1x8x8xf32, #tpu.memory_space<vmem>>, vector<1x8x8xf32>
    %6 = vector.shape_cast %5 : vector<1x8x8xf32> to vector<8x8xf32>
    %cst = arith.constant dense<0.000000e+00> : vector<8x8xf32>
    %7 = tpu.matmul %4, %4, %cst {dimension_numbers = #tpu.dot_dimension_numbers<[1], [1], [0], [0], [0, 0, 1, 0], [], []>} : vector<8x256xf32>, vector<8x256xf32>, vector<8x8xf32> -> vector<8x8xf32>
    %8 = arith.addf %6, %7 : vector<8x8xf32>
    %c0_6 = arith.constant 0 : index
    %c0_7 = arith.constant 0 : index
    %c0_8 = arith.constant 0 : index
    %9 = vector.load %arg4[%c0_6, %c0_7, %c0_8] : memref<1x8x8xf32, #tpu.memory_space<vmem>>, vector<1x8x8xf32>
    %10 = vector.shape_cast %9 : vector<1x8x8xf32> to vector<8x8xf32>
    %11 = vector.shape_cast %8 : vector<8x8xf32> to vector<1x8x8xf32>
    tpu.vector_store %arg4[%c0_6, %c0_7, %c0_8], %11 {strides = array<i32>} : memref<1x8x8xf32, #tpu.memory_space<vmem>>, vector<1x8x8xf32>,
    %c0_9 = arith.constant 0 : index
    %c0_10 = arith.constant 0 : index
    %c0_11 = arith.constant 0 : index
    %12 = vector.load %arg3[%c0_9, %c0_10, %c0_11] : memref<1x8x1xf32, #tpu.memory_space<vmem>>, vector<1x8x1xf32>
    %13 = vector.shape_cast %12 : vector<1x8x1xf32> to vector<8x1xf32>
    %cst_12 = arith.constant dense<0.000000e+00> : vector<8xf32>
    %14 = vector.multi_reduction <add>, %4, %cst_12 [1] : vector<8x256xf32> to vector<8xf32>
    %15 = vector.shape_cast %14 : vector<8xf32> to vector<8x1xf32>
    %16 = arith.addf %13, %15 : vector<8x1xf32>
    %c0_13 = arith.constant 0 : index
    %c0_14 = arith.constant 0 : index
    %c0_15 = arith.constant 0 : index
    %17 = vector.load %arg3[%c0_13, %c0_14, %c0_15] : memref<1x8x1xf32, #tpu.memory_space<vmem>>, vector<1x8x1xf32>
    %18 = vector.shape_cast %17 : vector<1x8x1xf32> to vector<8x1xf32>
    %19 = vector.shape_cast %16 : vector<8x1xf32> to vector<1x8x1xf32>
    tpu.vector_store %arg3[%c0_13, %c0_14, %c0_15], %19 {strides = array<i32>} : memref<1x8x1xf32, #tpu.memory_space<vmem>>, vector<1x8x1xf32>,
    return
  }
  func.func @transform_0(%arg0: i32, %arg1: i32) -> (i32, i32, i32) {
    %c0_i32 = arith.constant 0 : i32
    %c0_i32_0 = arith.constant 0 : i32
    return %arg0, %c0_i32, %arg1 : i32, i32, i32
  }
  func.func @transform_1(%arg0: i32, %arg1: i32) -> (i32, i32, i32) {
    %c0_i32 = arith.constant 0 : i32
    %c0_i32_0 = arith.constant 0 : i32
    %c0_i32_1 = arith.constant 0 : i32
    return %arg0, %c0_i32, %c0_i32_0 : i32, i32, i32
  }
  func.func @transform_2(%arg0: i32, %arg1: i32) -> (i32, i32, i32) {
    %c0_i32 = arith.constant 0 : i32
    %c0_i32_0 = arith.constant 0 : i32
    %c0_i32_1 = arith.constant 0 : i32
    return %arg0, %c0_i32, %c0_i32_0 : i32, i32, i32
  }
}

</mosaic_0001>

<llo_original>
// kernel: tpu_custom_call.1
$region0: #{tpu_custom_call.1}
  #allocation0 [shape = 'u32[]', space=smem, size = 0x4, offset = 0x4, fixed_abs, tag = 'smem constant byte address 0x4 - core index']
  #allocation1 [shape = 'u32[144,128]{1,0:T(1,128)}', space=vmem, size = 0x12000, scoped, tag = 'internal scratch']
  %s0 = inlined_call_operand.hbm [shape: f32[2,8,256], index: 0, kind: input, shape index: {}]
  %s1 = inlined_call_operand.vmem [shape: f32[2,8,1], index: 1, kind: output, shape index: {0}]
  %s2 = inlined_call_operand.hbm [shape: f32[2,8,8], index: 2, kind: output, shape index: {1}]
  %3 = xla_tuple %s1, %s2
  %s4 = sld [smem:[#allocation0]]
  $region53: #{tpu_custom_call.1} parent=0
    _
  %s6 = ssub.s32 1, %s4
  %s7 = scalar_select 0, %s6, %s4
  $region1: #{tpu_custom_call.1} parent=0
    #allocation2 [shape = 'u8[16384]{0}', space=vmem, size = 0x4000, scoped, tag = 'input window, operand 0']
    #allocation3 [shape = 's32[2]{0}', space=sflag, size = 0x8, scoped, tag = 'scoped memory for tpu_custom_call.1']
    #allocation4 [shape = 's32[2]{0}', space=sflag, size = 0x8, scoped, tag = 'scoped memory for tpu_custom_call.1']
    #allocation5 [shape = 'u8[8192]{0}', space=vmem, size = 0x2000, scoped, tag = 'output window, operand 1']
    %8 = vsyncpa [#allocation3], 0
    %s9 = scalar_lea.sflag [#allocation3], 1
    %10 = vsyncpa %s9, 0
    %11 = vsyncpa [#allocation4], 0
    %s12 = scalar_lea.sflag [#allocation4], 1
    %13 = vsyncpa %s12, 0
    loop: start=0, step=1, limit=4
    $region2: #{tpu_custom_call.1} parent=1 // loop_pre_header
      _
    $region3: #{tpu_custom_call.1} parent=1 // loop_header
      %s15 = sphi 0, %s19
      %p16 = scmp.ge.s32.totalorder %s15, 4
      %s22 = sphi 0, %s34
      %s23 = sphi 0, %s30
      %s24 = sphi 0, %s22
      %s25 = sphi 0, %s23
      %s26 = sphi 0, %s24
      %s27 = sphi 0, %s25
      %s39 = sphi 0, %s41
      %s42 = sphi 0, %s39
      %s43 = sphi 0, %s42
      %s59 = sphi 0, %s43
      %s65 = sphi 0, %s67
      %s68 = sphi 0, %s65
      %s69 = sphi 0, %s68
      %s85 = sphi 0, %s69
      %s91 = sphi 0, %s93
      %s94 = sphi 0, %s91
      %s95 = sphi 0, %s94
      %s111 = sphi 0, %s95
    $region4: #{tpu_custom_call.1} parent=1 // loop_header_branch
      %18 = sbr.rel (%p16) target = $region8
    $region5: #{tpu_custom_call.1} parent=1 // loop_body
      %s20 = ssub.s32 %s15, 1
      %s21 = ssub.s32 %s15, 2
      %s28 = sadd.s32 1, %s23
      %p29 = scmp.ge.s32.totalorder %s28, 1
      %s30 = scalar_select %p29, 0, %s28
      %s31 = sadd.s32 1, %s22
      %s32 = scalar_select %p29, %s31, %s22
      %p33 = scmp.ge.s32.totalorder %s32, 2
      %s34 = scalar_select %p33, 0, %s32
      %s35 = ssub.s32 %s22, %s34
      %s36 = ssub.s32 %s23, %s30
      %s37 = sor.u32 %s35, %s36
      %p38 = scmp.eq.s32.totalorder %s37, 0
      %s40 = sadd.s32 %s39, 1
      %s41 = scalar_select %p38, %s39, %s40
      %p44 = pneg %p38
      %p45 = scmp.eq.s32.totalorder %s15, 1
      %p46 = por %p44, %p45
      %p47 = scmp.ne.s32.totalorder %s39, %s42
      %p48 = scmp.eq.s32.totalorder %s15, 0
      %p49 = por %p47, %p48
      %p50 = scmp.ne.s32.totalorder %s39, %s42
      %p51 = scmp.eq.s32.totalorder %s20, 1
      %p52 = por %p50, %p51
      %p53 = scmp.ne.s32.totalorder %s42, %s43
      %p54 = scmp.eq.s32.totalorder %s20, 0
      %p55 = por %p53, %p54
      %p56 = scmp.ne.s32.totalorder %s42, %s43
      %p57 = scmp.eq.s32.totalorder %s21, 1
      %p58 = por %p56, %p57
      %p60 = scmp.ne.s32.totalorder %s43, %s59
      %p61 = scmp.eq.s32.totalorder %s21, 0
      %p62 = por %p60, %p61
      %s63 = ssub.s32 %s22, %s34
      %p64 = scmp.eq.s32.totalorder %s63, 0
      %s66 = sadd.s32 %s65, 1
      %s67 = scalar_select %p64, %s65, %s66
      %p70 = pneg %p64
      %p71 = scmp.eq.s32.totalorder %s15, 1
      %p72 = por %p70, %p71
      %p73 = scmp.ne.s32.totalorder %s65, %s68
      %p74 = scmp.eq.s32.totalorder %s15, 0
      %p75 = por %p73, %p74
      %p76 = scmp.ne.s32.totalorder %s65, %s68
      %p77 = scmp.eq.s32.totalorder %s20, 1
      %p78 = por %p76, %p77
      %p79 = scmp.ne.s32.totalorder %s68, %s69
      %p80 = scmp.eq.s32.totalorder %s20, 0
      %p81 = por %p79, %p80
      %p82 = scmp.ne.s32.totalorder %s68, %s69
      %p83 = scmp.eq.s32.totalorder %s21, 1
      %p84 = por %p82, %p83
      %p86 = scmp.ne.s32.totalorder %s69, %s85
      %p87 = scmp.eq.s32.totalorder %s21, 0
      %p88 = por %p86, %p87
      %s89 = ssub.s32 %s22, %s34
      %p90 = scmp.eq.s32.totalorder %s89, 0
      %s92 = sadd.s32 %s91, 1
      %s93 = scalar_select %p90, %s91, %s92
      %p96 = pneg %p90
      %p97 = scmp.eq.s32.totalorder %s15, 1
      %p98 = por %p96, %p97
      %p99 = scmp.ne.s32.totalorder %s91, %s94
      %p100 = scmp.eq.s32.totalorder %s15, 0
      %p101 = por %p99, %p100
      %p102 = scmp.ne.s32.totalorder %s91, %s94
      %p103 = scmp.eq.s32.totalorder %s20, 1
      %p104 = por %p102, %p103
      %p105 = scmp.ne.s32.totalorder %s94, %s95
      %p106 = scmp.eq.s32.totalorder %s20, 0
      %p107 = por %p105, %p106
      %p108 = scmp.ne.s32.totalorder %s94, %s95
      %p109 = scmp.eq.s32.totalorder %s21, 1
      %p110 = por %p108, %p109
      %p112 = scmp.ne.s32.totalorder %s95, %s111
      %p113 = scmp.eq.s32.totalorder %s21, 0
      %p114 = por %p112, %p113
      %p115 = scmp.le.s32.totalorder 1, %s15
      %p116 = scmp.lt.s32.totalorder %s15, 3
      %p117 = pnand %p115, %p116
      %p118 = pneg %p117
      // Predicated region
      $region9: #{tpu_custom_call.1} parent=5 // pred_check
        _
      $region10: #{tpu_custom_call.1} parent=5 // pred_check_branch
        %120 = sbr.rel (%p117) target = $region12
      $region11: #{tpu_custom_call.1} parent=5 // pred_region
        %s121 = ssub.s32 %s15, 1
      $region12: #{tpu_custom_call.1} parent=5 // pred_fallthru
        _
      %p122 = scmp.lt.s32.totalorder %s15, 2
      // Predicated region
      $region13: #{tpu_custom_call.1} parent=5 // pred_check
        %p123 = pneg %p122
      $region14: #{tpu_custom_call.1} parent=5 // pred_check_branch
        %125 = sbr.rel (%p123) target = $region16
      $region15: #{tpu_custom_call.1} parent=5 // pred_region
        // Predicated region
        $region17: #{tpu_custom_call.1} parent=15 // pred_check
          %p126 = pneg %p49
        $region18: #{tpu_custom_call.1} parent=15 // pred_check_branch
          %128 = sbr.rel (%p126) target = $region20
        $region19: #{tpu_custom_call.1} parent=15 // pred_region
          %s129 = sand.u32 %s39, 1
          %s130 = scalar_lea.sflag [#allocation3], %s129
          %s131 = sand.u32 %s39, 1
          %s132 = smul.addr %s131, 16
          %s133 = scalar_lea.vmem [#allocation2], %s132
          %s134 = smul.u32 2, %s23
          %s136 = ssub.s32 256, 256
          %137 = vsyncadd %s130, %s136
          %s138 = smul.addr %s22, 2
          %s139 = sadd.s32 %s134, %s138
          %s140 = smul.addr %s139, 128
          %s141 = scalar_lea.hbm %s0, %s140
          %s143 = sshll.u32 %s133, 4
          %s144 = int_to_ptr.vmem [resolvable:$true] %s143
          %146 = dma.hbm_to_vmem [thread:$0]  %s141, 256, %s144, %s130
        $region20: #{tpu_custom_call.1} parent=15 // pred_fallthru
          _
      $region16: #{tpu_custom_call.1} parent=5 // pred_fallthru
        _
      %p147 = scmp.le.s32.totalorder 1, %s15
      %p148 = scmp.lt.s32.totalorder %s15, 3
      %p149 = pnand %p147, %p148
      %p150 = pneg %p149
      // Predicated region
      $region21: #{tpu_custom_call.1} parent=5 // pred_check
        _
      $region22: #{tpu_custom_call.1} parent=5 // pred_check_branch
        %152 = sbr.rel (%p149) target = $region24
      $region23: #{tpu_custom_call.1} parent=5 // pred_region
        %s153 = ssub.s32 %s15, 1
        %s154 = sand.u32 %s42, 1
        %s155 = scalar_lea.sflag [#allocation3], %s154
        %s156 = sand.u32 %s42, 1
        %s157 = smul.addr %s156, 16
        %s158 = scalar_lea.vmem [#allocation2], %s157
        // Predicated region
        $region25: #{tpu_custom_call.1} parent=23 // pred_check
          %p159 = pneg %p55
        $region26: #{tpu_custom_call.1} parent=23 // pred_check_branch
          %161 = sbr.rel (%p159) target = $region28
        $region27: #{tpu_custom_call.1} parent=23 // pred_region
          %162 = dma.done %s155, 256
        $region28: #{tpu_custom_call.1} parent=23 // pred_fallthru
          _
        %s163 = sand.u32 %s42, 1
        %s164 = scalar_lea.sflag [#allocation3], %s163
        %s165 = sand.u32 %s42, 1
        %s166 = smul.addr %s165, 16
        %s167 = scalar_lea.vmem [#allocation2], %s166
        %p168 = pneg %p55
        %p169 = pneg %p52
        %p170 = pneg %p81
        %p171 = pneg %p78
        %p172 = scmp.lt.s32.totalorder %s24, 1
        %s173 = scalar_select %p172, %s24, 1
        %s174 = smul.addr %s173, 8
        %s175 = scalar_lea.vmem %s1, %s174
        %p176 = pneg %p107
        %p177 = pneg %p104
        %s178 = sand.u32 %s94, 1
        %s179 = scalar_lea.sflag [#allocation4], %s178
        %s180 = sand.u32 %s94, 1
        %s181 = smul.addr %s180, 8
        %s182 = scalar_lea.vmem [#allocation5], %s181
        %s183 = smul.u32 2, %s25
        %p184 = scmp.lt.s32.totalorder %s24, 1
        %s185 = scalar_select %p184, %s24, 1
        %s186 = smul.addr %s185, 8
        %s187 = scalar_lea.vmem %s1, %s186
        %p188 = scmp.eq.s32.totalorder %s25, 0
        // Predicated region
        $region29: #{tpu_custom_call.1} parent=23 // pred_check
          %p189 = pneg %p188
        $region30: #{tpu_custom_call.1} parent=23 // pred_check_branch
          %191 = sbr.rel (%p189) target = $region32
        $region31: #{tpu_custom_call.1} parent=23 // pred_region
          %vm192 = vcmask 7168
          %193 = vst.msk [vmem:[%s187] sm:$0xff] %vm192, 0.0
          %vm194 = vcmask 64512
          %195 = vst.msk [vmem:[%s182] sm:$0xff] %vm194, 0.0
        $region32: #{tpu_custom_call.1} parent=23 // pred_fallthru
          _
        %v196 = vld [vmem:[%s158] sm:$0xff]
        %v197 = vld [vmem:[%s158 + $0x8] sm:$0xff]
        %v198 = vld [vmem:[%s182] sm:$0xff]
        %199 = vmatprep.subr.mxu0 %v197
        %200 = vmatpush1.xpose.msra.mxu0 %v196
        %201 = vmatprep.subr.mxu0 0.0
        %202 = vmatpush1.xpose.msra.mxu0 0.0
        %203 = vmatprep.subr.mxu0 0.0
        %204 = vmatpush1.xpose.msra.mxu0 0.0
        %205 = vmatprep.subr.mxu0 0.0
        %206 = vmatpush1.xpose.msra.mxu0 0.0
        %207 = vmatprep.subr.mxu0 0.0
        %208 = vmatpush1.xpose.msra.mxu0 0.0
        %209 = vmatprep.subr.mxu0 0.0
        %210 = vmatpush1.xpose.msra.mxu0 0.0
        %211 = vmatprep.subr.mxu0 0.0
        %212 = vmatpush1.xpose.msra.mxu0 0.0
        %213 = vmatprep.subr.mxu0 0.0
        %214 = vmatpush1.xpose.msra.mxu0 0.0
        %215 = vmatprep.subr.mxu0 0.0
        %216 = vmatpush1.xpose.msra.mxu0 0.0
        %217 = vmatprep.subr.mxu0 0.0
        %218 = vmatpush1.xpose.msra.mxu0 0.0
        %219 = vmatprep.subr.mxu0 0.0
        %220 = vmatpush1.xpose.msra.mxu0 0.0
        %221 = vmatprep.subr.mxu0 0.0
        %222 = vmatpush1.xpose.msra.mxu0 0.0
        %223 = vmatprep.subr.mxu0 0.0
        %224 = vmatpush1.xpose.msra.mxu0 0.0
        %225 = vmatprep.subr.mxu0 0.0
        %226 = vmatpush1.xpose.msra.mxu0 0.0
        %227 = vmatprep.subr.mxu0 0.0
        %228 = vmatpush1.xpose.msra.mxu0 0.0
        %229 = vmatprep.subr.mxu0 0.0
        %230 = vmatpush1.xpose.msra.mxu0 0.0
        %231 = vmatprep.subr.mxu0 0.0
        %232 = vmatpush1.xpose.msra.mxu0 0.0
        %233 = vmatprep.subr.mxu0 0.0
        %234 = vmatpush1.xpose.msra.mxu0 0.0
        %235 = vmatprep.subr.mxu0 0.0
        %236 = vmatpush1.xpose.msra.mxu0 0.0
        %237 = vmatprep.subr.mxu0 0.0
        %238 = vmatpush1.xpose.msra.mxu0 0.0
        %239 = vmatprep.subr.mxu0 0.0
        %240 = vmatpush1.xpose.msra.mxu0 0.0
        %241 = vmatprep.subr.mxu0 0.0
        %242 = vmatpush1.xpose.msra.mxu0 0.0
        %243 = vmatprep.subr.mxu0 0.0
        %244 = vmatpush1.xpose.msra.mxu0 0.0
        %245 = vmatprep.subr.mxu0 0.0
        %246 = vmatpush1.xpose.msra.mxu0 0.0
        %247 = vmatprep.subr.mxu0 0.0
        %248 = vmatpush1.xpose.msra.mxu0 0.0
        %249 = vmatprep.subr.mxu0 0.0
        %250 = vmatpush1.xpose.msra.mxu0 0.0
        %251 = vmatprep.subr.mxu0 0.0
        %252 = vmatpush1.xpose.msra.mxu0 0.0
        %253 = vmatprep.subr.mxu0 0.0
        %254 = vmatpush1.xpose.msra.mxu0 0.0
        %255 = vmatprep.subr.mxu0 0.0
        %256 = vmatpush1.xpose.msra.mxu0 0.0
        %257 = vmatprep.subr.mxu0 0.0
        %258 = vmatpush1.xpose.msra.mxu0 0.0
        %259 = vmatprep.subr.mxu0 0.0
        %260 = vmatpush1.xpose.msra.mxu0 0.0
        %261 = vmatprep.subr.mxu0 0.0
        %262 = vmatpush1.xpose.msra.mxu0 0.0
        %263 = vmatprep.mubr.f32.mxu0 %v197
        %264 = vmatmul.mubr.f32.gmra.mrb[0].mxu0 %v196
        %v265 = vpop.f32.mrb[0].mxu0
        %v266 = vadd.f32 0.0, %v265
        %v267 = vpop.f32.mrb[0].mxu0
        %268 = vdwg.mxu0
        %v269 = vadd.f32 %v198, %v266
        %vm270 = vcmask 64512
        %271 = vst.msk [vmem:[%s182] sm:$0xff] %vm270, %v269
        %v272 = vld [vmem:[%s187] sm:$0xff]
        %v273 = vadd.f32 %v196, %v197
        %274 = vadd.xlane.f32.xlu0 %v273
        %v275 = vpop.xlane.xlu0 %274
        %v276 = vadd.f32 %v272, %v275
        %vm277 = vcmask 7168
        %278 = vst.msk [vmem:[%s187] sm:$0xff] %vm277, %v276
        %p279 = scmp.lt.s32.totalorder %s24, 1
        %s280 = scalar_select %p279, %s24, 1
        %s281 = smul.addr %s280, 8
        %s282 = scalar_lea.vmem %s1, %s281
        %s283 = sand.u32 %s94, 1
        %s284 = scalar_lea.sflag [#allocation4], %s283
        %s285 = sand.u32 %s94, 1
        %s286 = smul.addr %s285, 8
        %s287 = scalar_lea.vmem [#allocation5], %s286
        // Predicated region
        $region33: #{tpu_custom_call.1} parent=23 // pred_check
          %p288 = pneg %p78
        $region34: #{tpu_custom_call.1} parent=23 // pred_check_branch
          %290 = sbr.rel (%p288) target = $region36
        $region35: #{tpu_custom_call.1} parent=23 // pred_region
          _
        $region36: #{tpu_custom_call.1} parent=23 // pred_fallthru
          _
        // Predicated region
        $region37: #{tpu_custom_call.1} parent=23 // pred_check
          %p291 = pneg %p104
        $region38: #{tpu_custom_call.1} parent=23 // pred_check_branch
          %293 = sbr.rel (%p291) target = $region40
        $region39: #{tpu_custom_call.1} parent=23 // pred_region
          %s295 = ssub.s32 128, 128
          %296 = vsyncadd %s284, %s295
          %s297 = smul.addr %s24, 128
          %s298 = scalar_lea.hbm %s2, %s297
          %s300 = sshll.u32 %s287, 4
          %s301 = int_to_ptr.vmem [resolvable:$true] %s300
          %303 = dma.vmem_to_hbm [thread:$0]  %s301, 128, %s298, %s284
        $region40: #{tpu_custom_call.1} parent=23 // pred_fallthru
          _
      $region24: #{tpu_custom_call.1} parent=5 // pred_fallthru
        _
      %p304 = scmp.le.s32.totalorder 2, %s15
      // Predicated region
      $region41: #{tpu_custom_call.1} parent=5 // pred_check
        %p305 = pneg %p304
      $region42: #{tpu_custom_call.1} parent=5 // pred_check_branch
        %307 = sbr.rel (%p305) target = $region44
      $region43: #{tpu_custom_call.1} parent=5 // pred_region
        %s308 = ssub.s32 %s15, 2
        // Predicated region
        $region45: #{tpu_custom_call.1} parent=43 // pred_check
          %p309 = pneg %p84
        $region46: #{tpu_custom_call.1} parent=43 // pred_check_branch
          %311 = sbr.rel (%p309) target = $region48
        $region47: #{tpu_custom_call.1} parent=43 // pred_region
          %p312 = scmp.lt.s32.totalorder %s26, 1
          %s313 = scalar_select %p312, %s26, 1
          %s314 = smul.addr %s313, 8
          %s315 = scalar_lea.vmem %s1, %s314
        $region48: #{tpu_custom_call.1} parent=43 // pred_fallthru
          _
        // Predicated region
        $region49: #{tpu_custom_call.1} parent=43 // pred_check
          %p316 = pneg %p110
        $region50: #{tpu_custom_call.1} parent=43 // pred_check_branch
          %318 = sbr.rel (%p316) target = $region52
        $region51: #{tpu_custom_call.1} parent=43 // pred_region
          %s319 = sand.u32 %s95, 1
          %s320 = scalar_lea.sflag [#allocation4], %s319
          %s321 = sand.u32 %s95, 1
          %s322 = smul.addr %s321, 8
          %s323 = scalar_lea.vmem [#allocation5], %s322
          %324 = dma.done %s320, 128
        $region52: #{tpu_custom_call.1} parent=43 // pred_fallthru
          _
      $region44: #{tpu_custom_call.1} parent=5 // pred_fallthru
        _
    $region6: #{tpu_custom_call.1} parent=1 // loop_footer
      %s19 = sadd.s32 1, %s15
    $region7: #{tpu_custom_call.1} parent=1 // loop_footer_branch
      %14 = sbr.rel target = $region3
    $region8: #{tpu_custom_call.1} parent=1 // loop_exit
      _
    %325 = vsyncpa [#allocation3], 1
    %s326 = scalar_lea.sflag [#allocation3], 1
    %327 = vsyncpa %s326, 1
    %328 = vsyncpa [#allocation4], 1
    %s329 = scalar_lea.sflag [#allocation4], 1
    %330 = vsyncpa %s329, 1

</llo_original>
